<compile_context>
chip_gen: v7x
topology: tpu7x:2x2x1
jax: 0.10.0
libtpu: 0.0.40
codegen_flags: <defaults>
</compile_context>

<pallas_src>
import functools

import jax
import jax.numpy as jnp
from jax.experimental import pallas as pl
from jax.experimental.pallas import tpu as pltpu

LN_EPS = 1e-5  # PyTorch nn.LayerNorm default


def _round_up(n, m):
    return (n + m - 1) // m * m


def _ffn_kernel(x_ref, w1_ref, b1_ref, w2_ref, b2_ref, g_ref, beta_ref,
                o_ref, acc_ref, *, d_real):
    """One (tm, Dp) row tile; grid axis 1 walks tiles of the intermediate dim."""
    k = pl.program_id(1)

    @pl.when(k == 0)
    def _():
        acc_ref[...] = jnp.zeros_like(acc_ref)

    # x tile stays f32 for the residual / LayerNorm; bf16 copies feed the MXU.
    x = x_ref[...].astype(jnp.float32)

    # Linear(D -> H_tile) + ReLU   (bf16 MXU matmul, f32 accumulation)
    h = jnp.dot(x.astype(jnp.bfloat16), w1_ref[...],
                preferred_element_type=jnp.float32)
    h = jnp.maximum(h + b1_ref[...], 0.0)

    # Partial Linear(H_tile -> D), accumulated over the H grid axis in f32.
    acc_ref[...] += jnp.dot(h.astype(jnp.bfloat16), w2_ref[...],
                            preferred_element_type=jnp.float32)

    @pl.when(k == pl.num_programs(1) - 1)
    def _():
        # Second bias, dropout (eval mode = identity), residual add.
        r = acc_ref[...] + b2_ref[...] + x

        # LayerNorm over the real feature width, one-pass statistics.
        # (Padded columns of r are exactly zero, so sums over Dp == sums over D.)
        inv_d = 1.0 / d_real
        s = jnp.sum(r, axis=-1, keepdims=True)
        sq = jnp.sum(r * r, axis=-1, keepdims=True)
        mean = s * inv_d
        var = jnp.maximum(sq * inv_d - mean * mean, 0.0)
        normed = (r - mean) * jax.lax.rsqrt(var + LN_EPS)
        o_ref[...] = (normed * g_ref[...] + beta_ref[...]).astype(o_ref.dtype)


@functools.partial(jax.jit, static_argnames=("tm", "th"))
def transformer_feed_forward(x, w1, b1, w2, b2, gamma, beta, *, tm=256, th=2048):
    """x: (B, S, D) float32. w1: (D, H), w2: (H, D). Returns (B, S, D)."""
    B, S, D = x.shape
    H = w1.shape[1]
    M = B * S

    # Lane-dense padding of the feature / intermediate dims.
    Dp = _round_up(D, 128)
    Hp = _round_up(H, 128)

    # Row tile: big (>=256) when the input allows, multiple of 8 always.
    tm_eff = min(tm, _round_up(M, 8))
    Mp = _round_up(M, tm_eff)

    # Intermediate tile: multiple of 128; Hp re-padded so it divides evenly.
    th_eff = min(th, Hp)
    Hp = _round_up(Hp, th_eff)
    num_k = Hp // th_eff

    # Pad inputs (zeros in the pad region keep matmuls / LN sums exact).
    x2 = jnp.pad(x.reshape(M, D), ((0, Mp - M), (0, Dp - D)))
    w1p = jnp.pad(w1, ((0, Dp - D), (0, Hp - H))).astype(jnp.bfloat16)
    w2p = jnp.pad(w2, ((0, Hp - H), (0, Dp - D))).astype(jnp.bfloat16)
    b1p = jnp.pad(b1, (0, Hp - H)).reshape(1, Hp).astype(jnp.float32)
    b2p = jnp.pad(b2, (0, Dp - D)).reshape(1, Dp).astype(jnp.float32)
    gp = jnp.pad(gamma, (0, Dp - D)).reshape(1, Dp).astype(jnp.float32)
    bp = jnp.pad(beta, (0, Dp - D)).reshape(1, Dp).astype(jnp.float32)

    # Single-buffer operands whose block index never changes; default (double)
    # buffering for the weight tiles when H is actually tiled.
    const_mode = pl.Buffered(1)
    w_mode = const_mode if num_k == 1 else None

    # Explicit VMEM budget for the resident / pipelined blocks (+2x headroom).
    weight_bufs = 1 if num_k == 1 else 2
    wbytes = weight_bufs * (Dp * th_eff + th_eff * Dp) * 2          # bf16 W1+W2
    iobytes = 2 * (tm_eff * Dp * 4) * 2                             # x + out, 2-deep
    scratch_bytes = tm_eff * Dp * 4                                 # accumulator
    interm = tm_eff * th_eff * 6                                    # h f32 + bf16 copy
    small = (weight_bufs * th_eff + 3 * Dp) * 4
    vmem_limit = int(min(max(2 * (wbytes + iobytes + scratch_bytes + interm + small),
                             32 * 1024 * 1024),
                         96 * 1024 * 1024))

    cost = pl.CostEstimate(
        flops=4 * Mp * Dp * Hp,                       # two matmuls: 2*M*D*H each
        transcendentals=Mp,                           # one rsqrt per row
        bytes_accessed=2 * Mp * Dp * 4 + 2 * Dp * Hp * 2 + (Hp + 3 * Dp) * 4,
    )

    out2 = pl.pallas_call(
        functools.partial(_ffn_kernel, d_real=D),
        out_shape=jax.ShapeDtypeStruct((Mp, Dp), x.dtype),
        grid_spec=pltpu.PrefetchScalarGridSpec(
            num_scalar_prefetch=0,
            grid=(Mp // tm_eff, num_k),
            in_specs=[
                pl.BlockSpec((tm_eff, Dp), lambda i, k: (i, 0)),      # x rows
                pl.BlockSpec((Dp, th_eff), lambda i, k: (0, k),
                             pipeline_mode=w_mode),                    # W1 (bf16)
                pl.BlockSpec((1, th_eff), lambda i, k: (0, k),
                             pipeline_mode=w_mode),                    # b1
                pl.BlockSpec((th_eff, Dp), lambda i, k: (k, 0),
                             pipeline_mode=w_mode),                    # W2 (bf16)
                pl.BlockSpec((1, Dp), lambda i, k: (0, 0),
                             pipeline_mode=const_mode),                # b2
                pl.BlockSpec((1, Dp), lambda i, k: (0, 0),
                             pipeline_mode=const_mode),                # ln gamma
                pl.BlockSpec((1, Dp), lambda i, k: (0, 0),
                             pipeline_mode=const_mode),                # ln beta
            ],
            out_specs=pl.BlockSpec((tm_eff, Dp), lambda i, k: (i, 0)),
            scratch_shapes=[pltpu.VMEM((tm_eff, Dp), jnp.float32)],
        ),
        compiler_params=pltpu.CompilerParams(
            dimension_semantics=("parallel", "arbitrary"),
            vmem_limit_bytes=vmem_limit,
        ),
        cost_estimate=cost,
    )(x2, w1p, b1p, w2p, b2p, gp, bp)

    return out2[:M, :D].reshape(B, S, D)


def init_params(key, input_size, intermediate_size):
    """Deterministic init mimicking nn.Linear defaults (U(-1/sqrt(fan_in), ...))."""
    k1, k2, k3, k4 = jax.random.split(key, 4)
    lim1 = 1.0 / jnp.sqrt(input_size)
    lim2 = 1.0 / jnp.sqrt(intermediate_size)
    # Weights stored transposed relative to PyTorch: (in, out) so x @ W applies.
    w1 = jax.random.uniform(k1, (input_size, intermediate_size),
                            jnp.float32, -lim1, lim1)
    b1 = jax.random.uniform(k2, (intermediate_size,), jnp.float32, -lim1, lim1)
    w2 = jax.random.uniform(k3, (intermediate_size, input_size),
                            jnp.float32, -lim2, lim2)
    b2 = jax.random.uniform(k4, (input_size,), jnp.float32, -lim2, lim2)
    gamma = jnp.ones((input_size,), jnp.float32)
    beta = jnp.zeros((input_size,), jnp.float32)
    return w1, b1, w2, b2, gamma, beta


def _reference(x, w1, b1, w2, b2, gamma, beta):
    h = jnp.maximum(x @ w1 + b1, 0.0)
    y = h @ w2 + b2
    r = y + x
    mean = jnp.mean(r, axis=-1, keepdims=True)
    var = jnp.mean((r - mean) ** 2, axis=-1, keepdims=True)
    return (r - mean) / jnp.sqrt(var + LN_EPS) * gamma + beta


if __name__ == "__main__":
    B, S, D, H = 2, 8, 32, 64  # batch, seq, input_size, intermediate_size
    key = jax.random.PRNGKey(0)
    kx, kp = jax.random.split(key)

    x = jax.random.normal(kx, (B, S, D), jnp.float32)
    params = init_params(kp, D, H)

    out = transformer_feed_forward(x, *params)
    out = jax.block_until_ready(out)

    ref = _reference(x, *params)
    assert out.shape == (B, S, D)
    # bf16 MXU operands -> loosened tolerance vs the f32 reference.
    assert jnp.allclose(out, ref, atol=5e-2, rtol=5e-2), "mismatch vs JAX reference"

    print("KERNEL_OK")
</pallas_src>

<mosaic_0001>
module attributes {stable_mosaic.version = 11 : i64} {
  func.func @_ffn_kernel(%arg0: i32, %arg1: i32, %arg2: memref<16x128xf32, #tpu.memory_space<vmem>>, %arg3: memref<128x128xbf16, #tpu.memory_space<vmem>>, %arg4: memref<1x128xf32, #tpu.memory_space<vmem>>, %arg5: memref<128x128xbf16, #tpu.memory_space<vmem>>, %arg6: memref<1x128xf32, #tpu.memory_space<vmem>>, %arg7: memref<1x128xf32, #tpu.memory_space<vmem>>, %arg8: memref<1x128xf32, #tpu.memory_space<vmem>>, %arg9: memref<16x128xf32, #tpu.memory_space<vmem>>, %arg10: memref<16x128xf32, #tpu.memory_space<vmem>>) attributes {dimension_semantics = [#tpu.dimension_semantics<parallel>, #tpu.dimension_semantics<arbitrary>], iteration_bounds = array<i64: 1, 1>, scalar_prefetch = 0 : i64, scratch_operands = 1 : i64, tpu.core_type = #tpu.core_type<tc>, window_params = [{transform_indices = @transform_0, window_bounds = array<i64: 16, 128>}, {pipeline_mode = #tpu.pipeline_mode<synchronous>, transform_indices = @transform_1, window_bounds = array<i64: 128, 128>}, {pipeline_mode = #tpu.pipeline_mode<synchronous>, transform_indices = @transform_2, window_bounds = array<i64: 1, 128>}, {pipeline_mode = #tpu.pipeline_mode<synchronous>, transform_indices = @transform_3, window_bounds = array<i64: 128, 128>}, {pipeline_mode = #tpu.pipeline_mode<synchronous>, transform_indices = @transform_4, window_bounds = array<i64: 1, 128>}, {pipeline_mode = #tpu.pipeline_mode<synchronous>, transform_indices = @transform_5, window_bounds = array<i64: 1, 128>}, {pipeline_mode = #tpu.pipeline_mode<synchronous>, transform_indices = @transform_6, window_bounds = array<i64: 1, 128>}, {transform_indices = @transform_7, window_bounds = array<i64: 16, 128>}]} {
    %c0_i32 = arith.constant 0 : i32
    %0 = arith.cmpi eq, %arg1, %c0_i32 : i32
    %1 = arith.extui %0 : i1 to i32
    %c0_i32_0 = arith.constant 0 : i32
    %2 = arith.cmpi ne, %1, %c0_i32_0 : i32
    scf.if %2 {
      %cst_16 = arith.constant 0.000000e+00 : f32
      %21 = vector.broadcast %cst_16 : f32 to vector<16x128xf32>
      %c0_17 = arith.constant 0 : index
      %c0_18 = arith.constant 0 : index
      %22 = vector.load %arg10[%c0_17, %c0_18] : memref<16x128xf32, #tpu.memory_space<vmem>>, vector<16x128xf32>
      tpu.vector_store %arg10[%c0_17, %c0_18], %21 {strides = array<i32>} : memref<16x128xf32, #tpu.memory_space<vmem>>, vector<16x128xf32>,
    } else {
    }
    %c0 = arith.constant 0 : index
    %c0_1 = arith.constant 0 : index
    %3 = vector.load %arg2[%c0, %c0_1] : memref<16x128xf32, #tpu.memory_space<vmem>>, vector<16x128xf32>
    %4 = arith.truncf %3 : vector<16x128xf32> to vector<16x128xbf16>
    %c0_2 = arith.constant 0 : index
    %c0_3 = arith.constant 0 : index
    %5 = vector.load %arg3[%c0_2, %c0_3] : memref<128x128xbf16, #tpu.memory_space<vmem>>, vector<128x128xbf16>
    %cst = arith.constant dense<0.000000e+00> : vector<16x128xf32>
    %6 = tpu.matmul %4, %5, %cst {dimension_numbers = #tpu.dot_dimension_numbers<[1], [0], [0], [1], [0, 0, 1, 1], [], []>} : vector<16x128xbf16>, vector<128x128xbf16>, vector<16x128xf32> -> vector<16x128xf32>
    %c0_4 = arith.constant 0 : index
    %c0_5 = arith.constant 0 : index
    %7 = vector.load %arg4[%c0_4, %c0_5] : memref<1x128xf32, #tpu.memory_space<vmem>>, vector<1x128xf32>
    %8 = vector.broadcast %7 : vector<1x128xf32> to vector<16x128xf32>
    %9 = arith.addf %6, %8 : vector<16x128xf32>
    %cst_6 = arith.constant 0.000000e+00 : f32
    %10 = vector.broadcast %cst_6 : f32 to vector<16x128xf32>
    %11 = arith.maximumf %9, %10 : vector<16x128xf32>
    %c0_7 = arith.constant 0 : index
    %c0_8 = arith.constant 0 : index
    %12 = vector.load %arg10[%c0_7, %c0_8] : memref<16x128xf32, #tpu.memory_space<vmem>>, vector<16x128xf32>
    %13 = arith.truncf %11 : vector<16x128xf32> to vector<16x128xbf16>
    %c0_9 = arith.constant 0 : index
    %c0_10 = arith.constant 0 : index
    %14 = vector.load %arg5[%c0_9, %c0_10] : memref<128x128xbf16, #tpu.memory_space<vmem>>, vector<128x128xbf16>
    %cst_11 = arith.constant dense<0.000000e+00> : vector<16x128xf32>
    %15 = tpu.matmul %13, %14, %cst_11 {dimension_numbers = #tpu.dot_dimension_numbers<[1], [0], [0], [1], [0, 0, 1, 1], [], []>} : vector<16x128xbf16>, vector<128x128xbf16>, vector<16x128xf32> -> vector<16x128xf32>
    %16 = arith.addf %12, %15 : vector<16x128xf32>
    %c0_12 = arith.constant 0 : index
    %c0_13 = arith.constant 0 : index
    %17 = vector.load %arg10[%c0_12, %c0_13] : memref<16x128xf32, #tpu.memory_space<vmem>>, vector<16x128xf32>
    tpu.vector_store %arg10[%c0_12, %c0_13], %16 {strides = array<i32>} : memref<16x128xf32, #tpu.memory_space<vmem>>, vector<16x128xf32>,
    %c0_i32_14 = arith.constant 0 : i32
    %18 = arith.cmpi eq, %arg1, %c0_i32_14 : i32
    %19 = arith.extui %18 : i1 to i32
    %c0_i32_15 = arith.constant 0 : i32
    %20 = arith.cmpi ne, %19, %c0_i32_15 : i32
    scf.if %20 {
      %c0_16 = arith.constant 0 : index
      %c0_17 = arith.constant 0 : index
      %21 = vector.load %arg10[%c0_16, %c0_17] : memref<16x128xf32, #tpu.memory_space<vmem>>, vector<16x128xf32>
      %c0_18 = arith.constant 0 : index
      %c0_19 = arith.constant 0 : index
      %22 = vector.load %arg6[%c0_18, %c0_19] : memref<1x128xf32, #tpu.memory_space<vmem>>, vector<1x128xf32>
      %23 = vector.broadcast %22 : vector<1x128xf32> to vector<16x128xf32>
      %24 = arith.addf %21, %23 : vector<16x128xf32>
      %25 = arith.addf %24, %3 : vector<16x128xf32>
      %cst_20 = arith.constant dense<0.000000e+00> : vector<16xf32>
      %26 = vector.multi_reduction <add>, %25, %cst_20 [1] : vector<16x128xf32> to vector<16xf32>
      %27 = vector.shape_cast %26 : vector<16xf32> to vector<16x1xf32>
      %28 = arith.mulf %25, %25 : vector<16x128xf32>
      %cst_21 = arith.constant dense<0.000000e+00> : vector<16xf32>
      %29 = vector.multi_reduction <add>, %28, %cst_21 [1] : vector<16x128xf32> to vector<16xf32>
      %30 = vector.shape_cast %29 : vector<16xf32> to vector<16x1xf32>
      %cst_22 = arith.constant 3.125000e-02 : f32
      %31 = vector.broadcast %cst_22 : f32 to vector<16x1xf32>
      %32 = arith.mulf %27, %31 : vector<16x1xf32>
      %cst_23 = arith.constant 3.125000e-02 : f32
      %33 = vector.broadcast %cst_23 : f32 to vector<16x1xf32>
      %34 = arith.mulf %30, %33 : vector<16x1xf32>
      %35 = arith.mulf %32, %32 : vector<16x1xf32>
      %36 = arith.subf %34, %35 : vector<16x1xf32>
      %cst_24 = arith.constant 0.000000e+00 : f32
      %37 = vector.broadcast %cst_24 : f32 to vector<16x1xf32>
      %38 = arith.maximumf %36, %37 : vector<16x1xf32>
      %39 = vector.broadcast %32 : vector<16x1xf32> to vector<16x128xf32>
      %40 = arith.subf %25, %39 : vector<16x128xf32>
      %cst_25 = arith.constant 9.99999974E-6 : f32
      %41 = vector.broadcast %cst_25 : f32 to vector<16x1xf32>
      %42 = arith.addf %38, %41 : vector<16x1xf32>
      %43 = math.rsqrt %42 : vector<16x1xf32>
      %44 = vector.broadcast %43 : vector<16x1xf32> to vector<16x128xf32>
      %45 = arith.mulf %40, %44 : vector<16x128xf32>
      %c0_26 = arith.constant 0 : index
      %c0_27 = arith.constant 0 : index
      %46 = vector.load %arg7[%c0_26, %c0_27] : memref<1x128xf32, #tpu.memory_space<vmem>>, vector<1x128xf32>
      %47 = vector.broadcast %46 : vector<1x128xf32> to vector<16x128xf32>
      %48 = arith.mulf %45, %47 : vector<16x128xf32>
      %c0_28 = arith.constant 0 : index
      %c0_29 = arith.constant 0 : index
      %49 = vector.load %arg8[%c0_28, %c0_29] : memref<1x128xf32, #tpu.memory_space<vmem>>, vector<1x128xf32>
      %50 = vector.broadcast %49 : vector<1x128xf32> to vector<16x128xf32>
      %51 = arith.addf %48, %50 : vector<16x128xf32>
      %c0_30 = arith.constant 0 : index
      %c0_31 = arith.constant 0 : index
      %52 = vector.load %arg9[%c0_30, %c0_31] : memref<16x128xf32, #tpu.memory_space<vmem>>, vector<16x128xf32>
      tpu.vector_store %arg9[%c0_30, %c0_31], %51 {strides = array<i32>} : memref<16x128xf32, #tpu.memory_space<vmem>>, vector<16x128xf32>,
    } else {
    }
    return
  }
  func.func @transform_0(%arg0: i32, %arg1: i32) -> (i32, i32) {
    %c0_i32 = arith.constant 0 : i32
    %c0_i32_0 = arith.constant 0 : i32
    return %arg0, %c0_i32 : i32, i32
  }
  func.func @transform_1(%arg0: i32, %arg1: i32) -> (i32, i32) {
    %c0_i32 = arith.constant 0 : i32
    %c0_i32_0 = arith.constant 0 : i32
    return %c0_i32, %arg1 : i32, i32
  }
  func.func @transform_2(%arg0: i32, %arg1: i32) -> (i32, i32) {
    %c0_i32 = arith.constant 0 : i32
    %c0_i32_0 = arith.constant 0 : i32
    return %c0_i32, %arg1 : i32, i32
  }
  func.func @transform_3(%arg0: i32, %arg1: i32) -> (i32, i32) {
    %c0_i32 = arith.constant 0 : i32
    %c0_i32_0 = arith.constant 0 : i32
    return %arg1, %c0_i32 : i32, i32
  }
  func.func @transform_4(%arg0: i32, %arg1: i32) -> (i32, i32) {
    %c0_i32 = arith.constant 0 : i32
    %c0_i32_0 = arith.constant 0 : i32
    %c0_i32_1 = arith.constant 0 : i32
    return %c0_i32, %c0_i32_0 : i32, i32
  }
  func.func @transform_5(%arg0: i32, %arg1: i32) -> (i32, i32) {
    %c0_i32 = arith.constant 0 : i32
    %c0_i32_0 = arith.constant 0 : i32
    %c0_i32_1 = arith.constant 0 : i32
    return %c0_i32, %c0_i32_0 : i32, i32
  }
  func.func @transform_6(%arg0: i32, %arg1: i32) -> (i32, i32) {
    %c0_i32 = arith.constant 0 : i32
    %c0_i32_0 = arith.constant 0 : i32
    %c0_i32_1 = arith.constant 0 : i32
    return %c0_i32, %c0_i32_0 : i32, i32
  }
  func.func @transform_7(%arg0: i32, %arg1: i32) -> (i32, i32) {
    %c0_i32 = arith.constant 0 : i32
    %c0_i32_0 = arith.constant 0 : i32
    return %arg0, %c0_i32 : i32, i32
  }
}

</mosaic_0001>

<llo_original>
// kernel: transformer_feed_forward.1
$region0: #{transformer_feed_forward.1}
  #allocation0 [shape = 'u32[]', space=smem, size = 0x4, offset = 0x4, fixed_abs, tag = 'smem constant byte address 0x4 - core index']
  #allocation1 [shape = 'u32[144,128]{1,0:T(1,128)}', space=vmem, size = 0x12000, scoped, tag = 'internal scratch']
  #allocation2 [shape = 'f32[16,128]{1,0:T(8,128)}', space=vmem, size = 0x2000, scoped, tag = 'scratch operand']
  %s0 = inlined_call_operand.vmem [shape: f32[16,128], index: 0, kind: input, shape index: {}]
  %s1 = inlined_call_operand.vmem [shape: bf16[128,128], index: 1, kind: input, shape index: {}]
  %s2 = inlined_call_operand.vmem [shape: f32[1,128], index: 2, kind: input, shape index: {}]
  %s3 = inlined_call_operand.vmem [shape: bf16[128,128], index: 3, kind: input, shape index: {}]
  %s4 = inlined_call_operand.vmem [shape: f32[1,128], index: 4, kind: input, shape index: {}]
  %s5 = inlined_call_operand.vmem [shape: f32[1,128], index: 5, kind: input, shape index: {}]
  %s6 = inlined_call_operand.vmem [shape: f32[1,128], index: 6, kind: input, shape index: {}]
  %s7 = inlined_call_operand.vmem [shape: f32[16,128], index: 7, kind: output, shape index: {}]
  %s8 = sld [smem:[#allocation0]]
  $region46: #{transformer_feed_forward.1} parent=0
    _
  %s10 = ssub.s32 1, %s8
  %s11 = scalar_select 0, %s10, %s8
  // Predicated region
  $region2: #{transformer_feed_forward.1} parent=0 // pred_check
    _
  $region3: #{transformer_feed_forward.1} parent=0 // pred_check_branch
    %13 = sbr.rel (0) target = $region5
  $region4: #{transformer_feed_forward.1} parent=0 // pred_region
    _
  $region5: #{transformer_feed_forward.1} parent=0 // pred_fallthru
    _
  // Predicated region
  $region6: #{transformer_feed_forward.1} parent=0 // pred_check
    _
  $region7: #{transformer_feed_forward.1} parent=0 // pred_check_branch
    %15 = sbr.rel (0) target = $region9
  $region8: #{transformer_feed_forward.1} parent=0 // pred_region
    _
  $region9: #{transformer_feed_forward.1} parent=0 // pred_fallthru
    _
  // Predicated region
  $region10: #{transformer_feed_forward.1} parent=0 // pred_check
    _
  $region11: #{transformer_feed_forward.1} parent=0 // pred_check_branch
    %17 = sbr.rel (0) target = $region13
  $region12: #{transformer_feed_forward.1} parent=0 // pred_region
    _
  $region13: #{transformer_feed_forward.1} parent=0 // pred_fallthru
    _
  // Predicated region
  $region14: #{transformer_feed_forward.1} parent=0 // pred_check
    _
  $region15: #{transformer_feed_forward.1} parent=0 // pred_check_branch
    %19 = sbr.rel (0) target = $region17
  $region16: #{transformer_feed_forward.1} parent=0 // pred_region
    _
  $region17: #{transformer_feed_forward.1} parent=0 // pred_fallthru
    _
  // Predicated region
  $region18: #{transformer_feed_forward.1} parent=0 // pred_check
    _
  $region19: #{transformer_feed_forward.1} parent=0 // pred_check_branch
    %21 = sbr.rel (0) target = $region21
  $region20: #{transformer_feed_forward.1} parent=0 // pred_region
    _
  $region21: #{transformer_feed_forward.1} parent=0 // pred_fallthru
    _
  // Predicated region
  $region22: #{transformer_feed_forward.1} parent=0 // pred_check
    _
  $region23: #{transformer_feed_forward.1} parent=0 // pred_check_branch
    %23 = sbr.rel (0) target = $region25
  $region24: #{transformer_feed_forward.1} parent=0 // pred_region
    _
  $region25: #{transformer_feed_forward.1} parent=0 // pred_fallthru
    _
  // Predicated region
  $region26: #{transformer_feed_forward.1} parent=0 // pred_check
    _
  $region27: #{transformer_feed_forward.1} parent=0 // pred_check_branch
    %25 = sbr.rel (0) target = $region29
  $region28: #{transformer_feed_forward.1} parent=0 // pred_region
    _
  $region29: #{transformer_feed_forward.1} parent=0 // pred_fallthru
    _
  %p27 = scmp.eq.s32.totalorder 0, 0
  // Predicated region
  $region30: #{transformer_feed_forward.1} parent=0 // pred_check
    %p28 = pneg %p27
  $region31: #{transformer_feed_forward.1} parent=0 // pred_check_branch
    %30 = sbr.rel (%p28) target = $region33
  $region32: #{transformer_feed_forward.1} parent=0 // pred_region
    %31 = vst [vmem:[#allocation2] sm:$0xff] 0.0
    %32 = vst [vmem:[#allocation2 + $0x8] sm:$0xff] 0.0
  $region33: #{transformer_feed_forward.1} parent=0 // pred_fallthru
    _
  %v33 = vld [vmem:[%s0] sm:$0xff]
  %v34 = vld [vmem:[%s0 + $0x8] sm:$0xff]
  %v35 = vpack.c.bf16 %v34, %v33
  %v36 = vld [vmem:[%s1] sm:$0xf]
  %v37 = vld [vmem:[%s1 + $0x4] sm:$0xf]
  %v38 = vld [vmem:[%s1 + $0x8] sm:$0xf]
  %v39 = vld [vmem:[%s1 + $0xc] sm:$0xf]
  %v40 = vld [vmem:[%s1 + $0x10] sm:$0xf]
  %v41 = vld [vmem:[%s1 + $0x14] sm:$0xf]
  %v42 = vld [vmem:[%s1 + $0x18] sm:$0xf]
  %v43 = vld [vmem:[%s1 + $0x1c] sm:$0xf]
  %v44 = vld [vmem:[%s1 + $0x20] sm:$0xf]
  %v45 = vld [vmem:[%s1 + $0x24] sm:$0xf]
  %v46 = vld [vmem:[%s1 + $0x28] sm:$0xf]
  %v47 = vld [vmem:[%s1 + $0x2c] sm:$0xf]
  %v48 = vld [vmem:[%s1 + $0x30] sm:$0xf]
  %v49 = vld [vmem:[%s1 + $0x34] sm:$0xf]
  %v50 = vld [vmem:[%s1 + $0x38] sm:$0xf]
  %v51 = vld [vmem:[%s1 + $0x3c] sm:$0xf]
  %v52 = vld [vmem:[%s2] sm:$0x1]
  %v54 = vlaneseq
  %v55 = vshrl.u32 %v54, 7
  %v56 = vsub.s32 0, %v55
  %v57 = vrot.slane %v52, %v56
  %v75 = vunpack.c.l.b16 %v36
  %v76 = vunpack.c.l.b16 %v37
  %v77 = vunpack.c.l.b16 %v38
  %v78 = vunpack.c.l.b16 %v39
  %v79 = vunpack.c.l.b16 %v40
  %v80 = vunpack.c.l.b16 %v41
  %v81 = vunpack.c.l.b16 %v42
  %v82 = vunpack.c.l.b16 %v43
  %v83 = vunpack.c.l.b16 %v44
  %v84 = vunpack.c.l.b16 %v45
  %v85 = vunpack.c.l.b16 %v46
  %v86 = vunpack.c.l.b16 %v47
  %v87 = vunpack.c.l.b16 %v48
  %v88 = vunpack.c.l.b16 %v49
  %v89 = vunpack.c.l.b16 %v50
  %v90 = vunpack.c.l.b16 %v51
  %v91 = vpack.c.b16 %v76, %v75
  %v92 = vpack.c.b16 %v78, %v77
  %v93 = vpack.c.b16 %v80, %v79
  %v94 = vpack.c.b16 %v82, %v81
  %v95 = vpack.c.b16 %v84, %v83
  %v96 = vpack.c.b16 %v86, %v85
  %v97 = vpack.c.b16 %v88, %v87
  %v98 = vpack.c.b16 %v90, %v89
  %107 = vmatprep.subr.bf16.mxu0 0
  %108 = vmatpush1.bf16.msra.mxu0 %v91
  %109 = vmatprep.subr.bf16.mxu0 0
  %110 = vmatpush1.bf16.msra.mxu0 %v92
  %111 = vmatprep.subr.bf16.mxu0 0
  %112 = vmatpush1.bf16.msra.mxu0 %v93
  %113 = vmatprep.subr.bf16.mxu0 0
  %114 = vmatpush1.bf16.msra.mxu0 %v94
  %115 = vmatprep.subr.bf16.mxu0 0
  %116 = vmatpush1.bf16.msra.mxu0 %v95
  %117 = vmatprep.subr.bf16.mxu0 0
  %118 = vmatpush1.bf16.msra.mxu0 %v96
  %119 = vmatprep.subr.bf16.mxu0 0
  %120 = vmatpush1.bf16.msra.mxu0 %v97
  %121 = vmatprep.subr.bf16.mxu0 0
  %122 = vmatpush1.bf16.msra.mxu0 %v98
  %123 = vmatprep.subr.bf16.mxu0 0
  %124 = vmatpush1.bf16.msra.mxu0 0
  %125 = vmatprep.subr.bf16.mxu0 0
  %126 = vmatpush1.bf16.msra.mxu0 0
  %127 = vmatprep.subr.bf16.mxu0 0
  %128 = vmatpush1.bf16.msra.mxu0 0
  %129 = vmatprep.subr.bf16.mxu0 0
  %130 = vmatpush1.bf16.msra.mxu0 0
  %131 = vmatprep.subr.bf16.mxu0 0
  %132 = vmatpush1.bf16.msra.mxu0 0
  %133 = vmatprep.subr.bf16.mxu0 0
  %134 = vmatpush1.bf16.msra.mxu0 0
  %135 = vmatprep.subr.bf16.mxu0 0
  %136 = vmatpush1.bf16.msra.mxu0 0
  %137 = vmatprep.subr.bf16.mxu0 0
  %138 = vmatpush1.bf16.msra.mxu0 0
  %139 = vmatprep.mubr.bf16.mxu0 0
  %140 = vmatmul.mubr.bf16.gmra.mrb[0].mxu0 %v35
  %v141 = vpop.f32.mrb[0].mxu0
  %v142 = vadd.f32 %v57, %v141
  %v143 = vpop.f32.mrb[0].mxu0
  %v144 = vpop.f32.mrb[0].mxu0
  %v145 = vadd.f32 %v57, %v144
  %v146 = vpop.f32.mrb[0].mxu0
  %147 = vdwg.mxu0
  %v148 = vmax.f32 %v142, 0.0
  %v149 = vmax.f32 %v145, 0.0
  %v150 = vld [vmem:[#allocation2] sm:$0xff]
  %v151 = vld [vmem:[#allocation2 + $0x8] sm:$0xff]
  %v152 = vpack.c.bf16 %v149, %v148
  %v153 = vld [vmem:[%s3] sm:$0xf]
  %v154 = vld [vmem:[%s3 + $0x4] sm:$0xf]
  %v155 = vld [vmem:[%s3 + $0x8] sm:$0xf]
  %v156 = vld [vmem:[%s3 + $0xc] sm:$0xf]
  %v157 = vld [vmem:[%s3 + $0x10] sm:$0xf]
  %v158 = vld [vmem:[%s3 + $0x14] sm:$0xf]
  %v159 = vld [vmem:[%s3 + $0x18] sm:$0xf]
  %v160 = vld [vmem:[%s3 + $0x1c] sm:$0xf]
  %v161 = vld [vmem:[%s3 + $0x20] sm:$0xf]
  %v162 = vld [vmem:[%s3 + $0x24] sm:$0xf]
  %v163 = vld [vmem:[%s3 + $0x28] sm:$0xf]
  %v164 = vld [vmem:[%s3 + $0x2c] sm:$0xf]
  %v165 = vld [vmem:[%s3 + $0x30] sm:$0xf]
  %v166 = vld [vmem:[%s3 + $0x34] sm:$0xf]
  %v167 = vld [vmem:[%s3 + $0x38] sm:$0xf]
  %v168 = vld [vmem:[%s3 + $0x3c] sm:$0xf]
  %v185 = vunpack.c.l.b16 %v153
  %v186 = vunpack.c.l.b16 %v154
  %v187 = vunpack.c.l.b16 %v155
  %v188 = vunpack.c.l.b16 %v156
  %v189 = vunpack.c.l.b16 %v157
  %v190 = vunpack.c.l.b16 %v158
  %v191 = vunpack.c.l.b16 %v159
  %v192 = vunpack.c.l.b16 %v160
  %v193 = vunpack.c.l.b16 %v161
  %v194 = vunpack.c.l.b16 %v162
  %v195 = vunpack.c.l.b16 %v163
  %v196 = vunpack.c.l.b16 %v164
  %v197 = vunpack.c.l.b16 %v165
  %v198 = vunpack.c.l.b16 %v166
  %v199 = vunpack.c.l.b16 %v167
  %v200 = vunpack.c.l.b16 %v168
  %v201 = vpack.c.b16 %v186, %v185
  %v202 = vpack.c.b16 %v188, %v187
  %v203 = vpack.c.b16 %v190, %v189
  %v204 = vpack.c.b16 %v192, %v191
  %v205 = vpack.c.b16 %v194, %v193
  %v206 = vpack.c.b16 %v196, %v195
  %v207 = vpack.c.b16 %v198, %v197
  %v208 = vpack.c.b16 %v200, %v199
  %217 = vmatprep.subr.bf16.mxu0 0
  %218 = vmatpush1.bf16.msra.mxu0 %v201
  %219 = vmatprep.subr.bf16.mxu0 0
  %220 = vmatpush1.bf16.msra.mxu0 %v202
  %221 = vmatprep.subr.bf16.mxu0 0
  %222 = vmatpush1.bf16.msra.mxu0 %v203
  %223 = vmatprep.subr.bf16.mxu0 0
  %224 = vmatpush1.bf16.msra.mxu0 %v204
  %225 = vmatprep.subr.bf16.mxu0 0
  %226 = vmatpush1.bf16.msra.mxu0 %v205
  %227 = vmatprep.subr.bf16.mxu0 0
  %228 = vmatpush1.bf16.msra.mxu0 %v206
  %229 = vmatprep.subr.bf16.mxu0 0
  %230 = vmatpush1.bf16.msra.mxu0 %v207
  %231 = vmatprep.subr.bf16.mxu0 0
  %232 = vmatpush1.bf16.msra.mxu0 %v208
  %233 = vmatprep.subr.bf16.mxu0 0
  %234 = vmatpush1.bf16.msra.mxu0 0
  %235 = vmatprep.subr.bf16.mxu0 0
  %236 = vmatpush1.bf16.msra.mxu0 0
  %237 = vmatprep.subr.bf16.mxu0 0
  %238 = vmatpush1.bf16.msra.mxu0 0
  %239 = vmatprep.subr.bf16.mxu0 0
  %240 = vmatpush1.bf16.msra.mxu0 0
  %241 = vmatprep.subr.bf16.mxu0 0
  %242 = vmatpush1.bf16.msra.mxu0 0
  %243 = vmatprep.subr.bf16.mxu0 0
  %244 = vmatpush1.bf16.msra.mxu0 0
  %245 = vmatprep.subr.bf16.mxu0 0
  %246 = vmatpush1.bf16.msra.mxu0 0
  %247 = vmatprep.subr.bf16.mxu0 0
  %248 = vmatpush1.bf16.msra.mxu0 0
  %249 = vmatprep.mubr.bf16.mxu0 0
  %250 = vmatmul.mubr.bf16.gmra.mrb[0].mxu0 %v152
  %v251 = vpop.f32.mrb[0].mxu0
  %v252 = vadd.f32 0.0, %v251
  %v253 = vpop.f32.mrb[0].mxu0
  %v254 = vpop.f32.mrb[0].mxu0
  %v255 = vadd.f32 0.0, %v254
  %v256 = vpop.f32.mrb[0].mxu0
  %257 = vdwg.mxu0
  %v258 = vadd.f32 %v150, %v252
  %v259 = vadd.f32 %v151, %v255
  %260 = vst [vmem:[#allocation2] sm:$0xff] %v258
  %261 = vst [vmem:[#allocation2 + $0x8] sm:$0xff] %v259
  // Predicated region
  $region34: #{transformer_feed_forward.1} parent=0 // pred_check
    %p262 = pneg %p27
  $region35: #{transformer_feed_forward.1} parent=0 // pred_check_branch
    %264 = sbr.rel (%p262) target = $region37
  $region36: #{transformer_feed_forward.1} parent=0 // pred_region
    %v265 = vld [vmem:[#allocation2] sm:$0xff]
    %v266 = vld [vmem:[#allocation2 + $0x8] sm:$0xff]
    %v267 = vld [vmem:[%s4] sm:$0x1]
    %v269 = vlaneseq
    %v270 = vshrl.u32 %v269, 7
    %v271 = vsub.s32 0, %v270
    %v272 = vrot.slane %v267, %v271
    %v274 = vadd.f32 %v265, %v272
    %v275 = vadd.f32 %v266, %v272
    %v276 = vadd.f32 %v274, %v33
    %v277 = vadd.f32 %v275, %v34
    %278 = vadd.xlane.f32.xlu0 %v276
    %v279 = vpop.xlane.xlu0 %278
    %280 = vadd.xlane.f32.xlu0 %v277
    %v281 = vpop.xlane.xlu0 %280
    %v282 = vmul.f32 %v276, %v276
    %v283 = vmul.f32 %v277, %v277
    %284 = vadd.xlane.f32.xlu0 %v282
    %v285 = vpop.xlane.xlu0 %284
    %286 = vadd.xlane.f32.xlu0 %v283
    %v287 = vpop.xlane.xlu0 %286
    %v288 = vmul.f32 %v279, 0.03125
    %v289 = vmul.f32 %v281, 0.03125
    %v290 = vmul.f32 %v285, 0.03125
    %v291 = vmul.f32 %v287, 0.03125
    %v292 = vmul.f32 %v288, %v288
    %v293 = vmul.f32 %v289, %v289
    %v294 = vsub.f32 %v290, %v292
    %v295 = vsub.f32 %v291, %v293
    %v296 = vmax.f32 %v294, 0.0
    %v297 = vmax.f32 %v295, 0.0
    %v298 = vsub.f32 %v276, %v288
    %v299 = vsub.f32 %v277, %v289
    %v300 = vadd.f32 %v296, 1e-05
    %v301 = vadd.f32 %v297, 1e-05
    %v302 = vrsqrt.pop %v300
    %v303 = vrsqrt.pop %v301
    %v304 = vmul.f32 %v298, %v302
    %v305 = vmul.f32 %v299, %v303
    %v306 = vld [vmem:[%s5] sm:$0x1]
    %v308 = vlaneseq
    %v309 = vshrl.u32 %v308, 7
    %v310 = vsub.s32 0, %v309
    %v311 = vrot.slane %v306, %v310
    %v313 = vmul.f32 %v304, %v311
    %v314 = vmul.f32 %v305, %v311
    %v315 = vld [vmem:[%s6] sm:$0x1]
    %v317 = vlaneseq
    %v318 = vshrl.u32 %v317, 7
    %v319 = vsub.s32 0, %v318
    %v320 = vrot.slane %v315, %v319
    %v322 = vadd.f32 %v313, %v320
    %v323 = vadd.f32 %v314, %v320
    %324 = vst [vmem:[%s7] sm:$0xff] %v322
    %325 = vst [vmem:[%s7 + $0x8] sm:$0xff] %v323
  $region37: #{transformer_feed_forward.1} parent=0 // pred_fallthru
    _
  // Predicated region
  $region38: #{transformer_feed_forward.1} parent=0 // pred_check
    _
  $region39: #{transformer_feed_forward.1} parent=0 // pred_check_branch
    %327 = sbr.rel (0) target = $region41
  $region40: #{transformer_feed_forward.1} parent=0 // pred_region
    _
  $region41: #{transformer_feed_forward.1} parent=0 // pred_fallthru
    _
  // Predicated region
  $region42: #{transformer_feed_forward.1} parent=0 // pred_check
    _
  $region43: #{transformer_feed_forward.1} parent=0 // pred_check_branch
    %329 = sbr.rel (0) target = $region45
  $region44: #{transformer_feed_forward.1} parent=0 // pred_region
    _
  $region45: #{transformer_feed_forward.1} parent=0 // pred_fallthru
    _

</llo_original>
